<compile_context>
chip_gen: v7x
topology: tpu7x:2x2x1
jax: 0.10.0
libtpu: 0.0.40
codegen_flags: <defaults>
</compile_context>

<pallas_src>
import math

import jax
import jax.numpy as jnp
from jax.experimental import pallas as pl
from jax.experimental.pallas import tpu as pltpu

_SHIFT = math.log(2.0)                 # torch.log(torch.tensor(2.0)).item()

_LANES = 128                           # vreg lane width
_TARGET_BLOCK_BYTES = 2 * 1024 * 1024  # ~2 MiB blocks: past the HBM-roofline knee,
                                       # VMEM-safe on every chip generation.


def _cdiv(a: int, b: int) -> int:
    return -(-a // b)


def _round_up(a: int, m: int) -> int:
    return _cdiv(a, m) * m


def _shifted_softplus_kernel(x_ref, o_ref):
    x = x_ref[...]
    # bf16 keeps the two transcendentals on the packed-bf16 EUP path (v6e/v7x);
    # everything else runs in f32.  v5e has no bf16 EUP and widens internally.
    compute_dtype = jnp.bfloat16 if x.dtype == jnp.bfloat16 else jnp.float32
    xc = x.astype(compute_dtype)
    # Numerically stable softplus: max(x, 0) + log1p(exp(-|x|))
    sp = jnp.maximum(xc, 0.0) + jnp.log1p(jnp.exp(-jnp.abs(xc)))
    o_ref[...] = (sp - _SHIFT).astype(o_ref.dtype)


def _shifted_softplus_jnp(x: jax.Array) -> jax.Array:
    """Plain-JAX fallback for tiny inputs and the <=127-element unaligned tail."""
    xf = x.astype(jnp.float32)
    sp = jnp.maximum(xf, 0.0) + jnp.log1p(jnp.exp(-jnp.abs(xf)))
    return (sp - _SHIFT).astype(x.dtype)


def _shifted_softplus_slab(slab: jax.Array, itemsize: int) -> jax.Array:
    """Run the kernel over a lane-dense (rows, 128) slab."""
    rows = slab.shape[0]
    dtype = slab.dtype

    # Minimum legal sublane multiple for this dtype (8 f32, 16 bf16, 32 fp8).
    sub_mult = max(8, 32 // max(1, itemsize))

    # Dtype-scaled row cap: constant ~2 MiB of bytes per block.
    row_cap = (_TARGET_BLOCK_BYTES // (_LANES * itemsize)) // sub_mult * sub_mult
    row_cap = max(sub_mult, row_cap)

    # Split into at least 2 grid steps when possible so both v7x TensorCores
    # stream; a ragged/overhanging final block is handled by Pallas masking.
    row_tile = min(row_cap, _round_up(_cdiv(rows, 2), sub_mult))
    num_steps = _cdiv(rows, row_tile)

    n_elems = rows * _LANES
    cost = pl.CostEstimate(
        flops=5 * n_elems,
        transcendentals=2 * n_elems,
        bytes_accessed=2 * n_elems * itemsize,
    )

    # Deeper input buffering only pays off with several grid steps; keep the
    # default double-buffering otherwise (also keeps tiny-input VMEM minimal).
    if num_steps >= 3:
        in_spec = pl.BlockSpec((row_tile, _LANES), lambda i: (i, 0),
                               pipeline_mode=pl.Buffered(3))
    else:
        in_spec = pl.BlockSpec((row_tile, _LANES), lambda i: (i, 0))

    return pl.pallas_call(
        _shifted_softplus_kernel,
        out_shape=jax.ShapeDtypeStruct((rows, _LANES), dtype),
        grid_spec=pltpu.PrefetchScalarGridSpec(
            num_scalar_prefetch=0,
            grid=(num_steps,),
            in_specs=[in_spec],
            out_specs=pl.BlockSpec((row_tile, _LANES), lambda i: (i, 0)),
        ),
        compiler_params=pltpu.CompilerParams(
            dimension_semantics=("parallel",),
            vmem_limit_bytes=32 * 1024 * 1024,
        ),
        cost_estimate=cost,
    )(slab)


def shifted_softplus(x: jax.Array) -> jax.Array:
    """Elementwise softplus(x) - log(2), matching the PyTorch ShiftedSoftplus."""
    orig_shape = x.shape
    dtype = x.dtype
    if not jnp.issubdtype(dtype, jnp.floating):
        raise TypeError(f"shifted_softplus expects a floating dtype, got {dtype}")
    itemsize = jnp.dtype(dtype).itemsize

    flat = x.reshape(-1)
    n = flat.shape[0]
    n_tail = n % _LANES
    n_main = n - n_tail

    if n_main == 0:
        # Fewer than 128 elements: a kernel launch is pure overhead.
        return _shifted_softplus_jnp(flat).reshape(orig_shape)

    main = flat if n_tail == 0 else flat[:n_main]
    slab = main.reshape(n_main // _LANES, _LANES)
    main_out = _shifted_softplus_slab(slab, itemsize).reshape(-1)

    if n_tail == 0:
        return main_out.reshape(orig_shape)

    # Unaligned: kernel handled the 128-aligned prefix; the <=127-element tail
    # is computed in plain jnp.  No full-tensor pad or output slice anymore.
    # TODO(synk): the concatenate still rewrites main_out once; a masked final-
    # block store inside the kernel would make this path fully zero-copy.
    tail_out = _shifted_softplus_jnp(flat[n_main:])
    return jnp.concatenate([main_out, tail_out]).reshape(orig_shape)


if __name__ == "__main__":
    key = jax.random.PRNGKey(0)
    k1, k2, k3, k4, k5 = jax.random.split(key, 5)

    # 1) Small NCHW-style f32 input, consistent with conv-pipeline usage.
    x = jax.random.normal(k1, (2, 4, 16, 16), dtype=jnp.float32) * 3.0
    y = jax.block_until_ready(shifted_softplus(x))
    y_ref = jax.nn.softplus(x) - _SHIFT
    assert y.shape == x.shape and y.dtype == x.dtype
    assert jnp.allclose(y, y_ref, atol=1e-6, rtol=1e-6)

    # 2) bf16 input exercises the packed-bf16 EUP math path.
    xb = (jax.random.normal(k2, (2, 8, 128), dtype=jnp.float32) * 3.0).astype(jnp.bfloat16)
    yb = jax.block_until_ready(shifted_softplus(xb))
    yb_ref = jax.nn.softplus(xb.astype(jnp.float32)) - _SHIFT
    assert yb.shape == xb.shape and yb.dtype == jnp.bfloat16
    assert jnp.allclose(yb.astype(jnp.float32), yb_ref, atol=5e-2, rtol=5e-2)

    # 3) Unaligned size > 128: aligned-prefix kernel + jnp tail.
    x3 = jax.random.normal(k3, (5, 37), dtype=jnp.float32) * 2.0
    y3 = jax.block_until_ready(shifted_softplus(x3))
    assert y3.shape == x3.shape
    assert jnp.allclose(y3, jax.nn.softplus(x3) - _SHIFT, atol=1e-6, rtol=1e-6)

    # 4) Tiny (<128 element) input: plain-jnp fallback path.
    x4 = jax.random.normal(k4, (3, 7, 5), dtype=jnp.float32)
    y4 = jax.block_until_ready(shifted_softplus(x4))
    assert jnp.allclose(y4, jax.nn.softplus(x4) - _SHIFT, atol=1e-6, rtol=1e-6)

    # 5) Medium input: >=3 grid steps, exercises the Buffered(3) pipeline path.
    x5 = jax.random.normal(k5, (8208, 128), dtype=jnp.float32) * 3.0
    y5 = jax.block_until_ready(shifted_softplus(x5))
    assert jnp.allclose(y5, jax.nn.softplus(x5) - _SHIFT, atol=1e-6, rtol=1e-6)

    print("KERNEL_OK")
</pallas_src>

<mosaic_0001>
module attributes {stable_mosaic.version = 11 : i64} {
  func.func @_shifted_softplus_kernel(%arg0: i32, %arg1: memref<8x128xf32, #tpu.memory_space<vmem>>, %arg2: memref<8x128xf32, #tpu.memory_space<vmem>>) attributes {dimension_semantics = [#tpu.dimension_semantics<parallel>], iteration_bounds = array<i64: 2>, scalar_prefetch = 0 : i64, scratch_operands = 0 : i64, tpu.core_type = #tpu.core_type<tc>, window_params = [{transform_indices = @transform_0, window_bounds = array<i64: 8, 128>}, {transform_indices = @transform_1, window_bounds = array<i64: 8, 128>}]} {
    %c0 = arith.constant 0 : index
    %c0_0 = arith.constant 0 : index
    %0 = vector.load %arg1[%c0, %c0_0] : memref<8x128xf32, #tpu.memory_space<vmem>>, vector<8x128xf32>
    %cst = arith.constant 0.000000e+00 : f32
    %1 = vector.broadcast %cst : f32 to vector<8x128xf32>
    %2 = arith.maximumf %0, %1 : vector<8x128xf32>
    %3 = math.absf %0 : vector<8x128xf32>
    %cst_1 = arith.constant 0.000000e+00 : f32
    %4 = vector.broadcast %cst_1 : f32 to vector<8x128xf32>
    %5 = arith.subf %4, %3 : vector<8x128xf32>
    %6 = math.exp %5 : vector<8x128xf32>
    %7 = math.log1p %6 : vector<8x128xf32>
    %8 = arith.addf %2, %7 : vector<8x128xf32>
    %cst_2 = arith.constant 0.693147182 : f32
    %9 = vector.broadcast %cst_2 : f32 to vector<8x128xf32>
    %10 = arith.subf %8, %9 : vector<8x128xf32>
    %c0_3 = arith.constant 0 : index
    %c0_4 = arith.constant 0 : index
    %11 = vector.load %arg2[%c0_3, %c0_4] : memref<8x128xf32, #tpu.memory_space<vmem>>, vector<8x128xf32>
    tpu.vector_store %arg2[%c0_3, %c0_4], %10 {strides = array<i32>} : memref<8x128xf32, #tpu.memory_space<vmem>>, vector<8x128xf32>,
    return
  }
  func.func @transform_0(%arg0: i32) -> (i32, i32) {
    %c0_i32 = arith.constant 0 : i32
    %c0_i32_0 = arith.constant 0 : i32
    return %arg0, %c0_i32 : i32, i32
  }
  func.func @transform_1(%arg0: i32) -> (i32, i32) {
    %c0_i32 = arith.constant 0 : i32
    %c0_i32_0 = arith.constant 0 : i32
    return %arg0, %c0_i32 : i32, i32
  }
}

</mosaic_0001>

<llo_original>
// kernel: tpu_custom_call.1
$region0: #{tpu_custom_call.1}
  #allocation0 [shape = 'u32[]', space=smem, size = 0x4, offset = 0x4, fixed_abs, tag = 'smem constant byte address 0x4 - core index']
  #allocation1 [shape = 'u32[144,128]{1,0:T(1,128)}', space=vmem, size = 0x12000, scoped, tag = 'internal scratch']
  %s0 = inlined_call_operand.hbm [shape: f32[16,128], index: 0, kind: input, shape index: {}]
  %s1 = inlined_call_operand.hbm [shape: f32[16,128], index: 1, kind: output, shape index: {}]
  %s2 = sld [smem:[#allocation0]]
  $region41: #{tpu_custom_call.1} parent=0
    _
  %s4 = ssub.s32 1, %s2
  %s5 = scalar_select 0, %s4, %s2
  $region1: #{tpu_custom_call.1} parent=0
    #allocation2 [shape = 'u8[8192]{0}', space=vmem, size = 0x2000, scoped, tag = 'input window, operand 0']
    #allocation3 [shape = 's32[2]{0}', space=sflag, size = 0x8, scoped, tag = 'scoped memory for tpu_custom_call.1']
    #allocation4 [shape = 's32[2]{0}', space=sflag, size = 0x8, scoped, tag = 'scoped memory for tpu_custom_call.1']
    #allocation5 [shape = 'u8[8192]{0}', space=vmem, size = 0x2000, scoped, tag = 'output window, operand 0']
    %6 = vsyncpa [#allocation3], 0
    %s7 = scalar_lea.sflag [#allocation3], 1
    %8 = vsyncpa %s7, 0
    %9 = vsyncpa [#allocation4], 0
    %s10 = scalar_lea.sflag [#allocation4], 1
    %11 = vsyncpa %s10, 0
    loop: start=0, step=1, limit=4
    $region2: #{tpu_custom_call.1} parent=1 // loop_pre_header
      _
    $region3: #{tpu_custom_call.1} parent=1 // loop_header
      %s13 = sphi 0, %s17
      %p14 = scmp.ge.s32.totalorder %s13, 4
      %s23 = sphi 0, %s25
      %s26 = sphi 0, %s23
      %s27 = sphi 0, %s26
      %s43 = sphi 0, %s27
      %s49 = sphi 0, %s51
      %s52 = sphi 0, %s49
      %s53 = sphi 0, %s52
      %s69 = sphi 0, %s53
    $region4: #{tpu_custom_call.1} parent=1 // loop_header_branch
      %16 = sbr.rel (%p14) target = $region8
    $region5: #{tpu_custom_call.1} parent=1 // loop_body
      %s18 = ssub.s32 %s13, 1
      %s19 = ssub.s32 %s13, 2
      %s20 = sadd.s32 %s13, 1
      %s21 = ssub.s32 %s13, %s20
      %p22 = scmp.eq.s32.totalorder %s21, 0
      %s24 = sadd.s32 %s23, 1
      %s25 = scalar_select %p22, %s23, %s24
      %p28 = pneg %p22
      %p29 = scmp.eq.s32.totalorder %s13, 1
      %p30 = por %p28, %p29
      %p31 = scmp.ne.s32.totalorder %s23, %s26
      %p32 = scmp.eq.s32.totalorder %s13, 0
      %p33 = por %p31, %p32
      %p34 = scmp.ne.s32.totalorder %s23, %s26
      %p35 = scmp.eq.s32.totalorder %s18, 1
      %p36 = por %p34, %p35
      %p37 = scmp.ne.s32.totalorder %s26, %s27
      %p38 = scmp.eq.s32.totalorder %s18, 0
      %p39 = por %p37, %p38
      %p40 = scmp.ne.s32.totalorder %s26, %s27
      %p41 = scmp.eq.s32.totalorder %s19, 1
      %p42 = por %p40, %p41
      %p44 = scmp.ne.s32.totalorder %s27, %s43
      %p45 = scmp.eq.s32.totalorder %s19, 0
      %p46 = por %p44, %p45
      %s47 = ssub.s32 %s13, %s20
      %p48 = scmp.eq.s32.totalorder %s47, 0
      %s50 = sadd.s32 %s49, 1
      %s51 = scalar_select %p48, %s49, %s50
      %p54 = pneg %p48
      %p55 = scmp.eq.s32.totalorder %s13, 1
      %p56 = por %p54, %p55
      %p57 = scmp.ne.s32.totalorder %s49, %s52
      %p58 = scmp.eq.s32.totalorder %s13, 0
      %p59 = por %p57, %p58
      %p60 = scmp.ne.s32.totalorder %s49, %s52
      %p61 = scmp.eq.s32.totalorder %s18, 1
      %p62 = por %p60, %p61
      %p63 = scmp.ne.s32.totalorder %s52, %s53
      %p64 = scmp.eq.s32.totalorder %s18, 0
      %p65 = por %p63, %p64
      %p66 = scmp.ne.s32.totalorder %s52, %s53
      %p67 = scmp.eq.s32.totalorder %s19, 1
      %p68 = por %p66, %p67
      %p70 = scmp.ne.s32.totalorder %s53, %s69
      %p71 = scmp.eq.s32.totalorder %s19, 0
      %p72 = por %p70, %p71
      %p73 = scmp.le.s32.totalorder 1, %s13
      %p74 = scmp.lt.s32.totalorder %s13, 3
      %p75 = pnand %p73, %p74
      %p76 = pneg %p75
      // Predicated region
      $region9: #{tpu_custom_call.1} parent=5 // pred_check
        _
      $region10: #{tpu_custom_call.1} parent=5 // pred_check_branch
        %78 = sbr.rel (%p75) target = $region12
      $region11: #{tpu_custom_call.1} parent=5 // pred_region
        %s79 = ssub.s32 %s13, 1
      $region12: #{tpu_custom_call.1} parent=5 // pred_fallthru
        _
      %p80 = scmp.lt.s32.totalorder %s13, 2
      // Predicated region
      $region13: #{tpu_custom_call.1} parent=5 // pred_check
        %p81 = pneg %p80
      $region14: #{tpu_custom_call.1} parent=5 // pred_check_branch
        %83 = sbr.rel (%p81) target = $region16
      $region15: #{tpu_custom_call.1} parent=5 // pred_region
        // Predicated region
        $region17: #{tpu_custom_call.1} parent=15 // pred_check
          %p84 = pneg %p33
        $region18: #{tpu_custom_call.1} parent=15 // pred_check_branch
          %86 = sbr.rel (%p84) target = $region20
        $region19: #{tpu_custom_call.1} parent=15 // pred_region
          %s87 = sand.u32 %s23, 1
          %s88 = scalar_lea.sflag [#allocation3], %s87
          %s89 = sand.u32 %s23, 1
          %s90 = smul.addr %s89, 8
          %s91 = scalar_lea.vmem [#allocation2], %s90
          %s93 = ssub.s32 128, 128
          %94 = vsyncadd %s88, %s93
          %s95 = smul.addr %s13, 128
          %s96 = scalar_lea.hbm %s0, %s95
          %s98 = sshll.u32 %s91, 4
          %s99 = int_to_ptr.vmem [resolvable:$true] %s98
          %101 = dma.hbm_to_vmem [thread:$0]  %s96, 128, %s99, %s88
        $region20: #{tpu_custom_call.1} parent=15 // pred_fallthru
          _
      $region16: #{tpu_custom_call.1} parent=5 // pred_fallthru
        _
      %p102 = scmp.le.s32.totalorder 1, %s13
      %p103 = scmp.lt.s32.totalorder %s13, 3
      %p104 = pnand %p102, %p103
      %p105 = pneg %p104
      // Predicated region
      $region21: #{tpu_custom_call.1} parent=5 // pred_check
        _
      $region22: #{tpu_custom_call.1} parent=5 // pred_check_branch
        %107 = sbr.rel (%p104) target = $region24
      $region23: #{tpu_custom_call.1} parent=5 // pred_region
        %s108 = ssub.s32 %s13, 1
        %s109 = sand.u32 %s26, 1
        %s110 = scalar_lea.sflag [#allocation3], %s109
        %s111 = sand.u32 %s26, 1
        %s112 = smul.addr %s111, 8
        %s113 = scalar_lea.vmem [#allocation2], %s112
        // Predicated region
        $region25: #{tpu_custom_call.1} parent=23 // pred_check
          %p114 = pneg %p39
        $region26: #{tpu_custom_call.1} parent=23 // pred_check_branch
          %116 = sbr.rel (%p114) target = $region28
        $region27: #{tpu_custom_call.1} parent=23 // pred_region
          %117 = dma.done %s110, 128
        $region28: #{tpu_custom_call.1} parent=23 // pred_fallthru
          _
        %s118 = sand.u32 %s26, 1
        %s119 = scalar_lea.sflag [#allocation3], %s118
        %s120 = sand.u32 %s26, 1
        %s121 = smul.addr %s120, 8
        %s122 = scalar_lea.vmem [#allocation2], %s121
        %p123 = pneg %p39
        %p124 = pneg %p36
        %p125 = pneg %p65
        %p126 = pneg %p62
        %s127 = sand.u32 %s52, 1
        %s128 = scalar_lea.sflag [#allocation4], %s127
        %s129 = sand.u32 %s52, 1
        %s130 = smul.addr %s129, 8
        %s131 = scalar_lea.vmem [#allocation5], %s130
        %v132 = vld [vmem:[%s113] sm:$0xff]
        %v133 = vmax.f32 %v132, 0.0
        %v134 = vand.u32 2147483647, %v132
        %v135 = vsub.f32 0.0, %v134
        %v136 = vmul.f32 %v135, 1.442695
        %v137 = vpow.pop %v136
        %v138 = vadd.f32 %v137, 1.0
        %v139 = vlog2.pop %v138
        %v140 = vmul.f32 %v139, 0.6931472
        %v141 = vmul.f32 -0.5, %v137
        %v142 = vadd.f32 %v141, 1.0
        %v143 = vmul.f32 %v142, %v137
        %v144 = vand.u32 2147483647, %v137
        %vm145 = vcmp.lt.f32.partialorder %v144, 0.0004427343
        %v146 = vsel %vm145, %v143, %v140
        %v147 = vadd.f32 %v133, %v146
        %v148 = vsub.f32 %v147, 0.6931472
        %149 = vst [vmem:[%s131] sm:$0xff] %v148
        %s150 = sand.u32 %s52, 1
        %s151 = scalar_lea.sflag [#allocation4], %s150
        %s152 = sand.u32 %s52, 1
        %s153 = smul.addr %s152, 8
        %s154 = scalar_lea.vmem [#allocation5], %s153
        // Predicated region
        $region29: #{tpu_custom_call.1} parent=23 // pred_check
          %p155 = pneg %p62
        $region30: #{tpu_custom_call.1} parent=23 // pred_check_branch
          %157 = sbr.rel (%p155) target = $region32
        $region31: #{tpu_custom_call.1} parent=23 // pred_region
          %s159 = ssub.s32 128, 128
          %160 = vsyncadd %s151, %s159
          %s161 = smul.addr %s18, 128
          %s162 = scalar_lea.hbm %s1, %s161
          %s164 = sshll.u32 %s154, 4
          %s165 = int_to_ptr.vmem [resolvable:$true] %s164
          %167 = dma.vmem_to_hbm [thread:$0]  %s165, 128, %s162, %s151
        $region32: #{tpu_custom_call.1} parent=23 // pred_fallthru
          _
      $region24: #{tpu_custom_call.1} parent=5 // pred_fallthru
        _
      %p168 = scmp.le.s32.totalorder 2, %s13
      // Predicated region
      $region33: #{tpu_custom_call.1} parent=5 // pred_check
        %p169 = pneg %p168
      $region34: #{tpu_custom_call.1} parent=5 // pred_check_branch
        %171 = sbr.rel (%p169) target = $region36
      $region35: #{tpu_custom_call.1} parent=5 // pred_region
        %s172 = ssub.s32 %s13, 2
        // Predicated region
        $region37: #{tpu_custom_call.1} parent=35 // pred_check
          %p173 = pneg %p68
        $region38: #{tpu_custom_call.1} parent=35 // pred_check_branch
          %175 = sbr.rel (%p173) target = $region40
        $region39: #{tpu_custom_call.1} parent=35 // pred_region
          %s176 = sand.u32 %s53, 1
          %s177 = scalar_lea.sflag [#allocation4], %s176
          %s178 = sand.u32 %s53, 1
          %s179 = smul.addr %s178, 8
          %s180 = scalar_lea.vmem [#allocation5], %s179
          %181 = dma.done %s177, 128
        $region40: #{tpu_custom_call.1} parent=35 // pred_fallthru
          _
      $region36: #{tpu_custom_call.1} parent=5 // pred_fallthru
        _
    $region6: #{tpu_custom_call.1} parent=1 // loop_footer
      %s17 = sadd.s32 1, %s13
    $region7: #{tpu_custom_call.1} parent=1 // loop_footer_branch
      %12 = sbr.rel target = $region3
    $region8: #{tpu_custom_call.1} parent=1 // loop_exit
      _
    %182 = vsyncpa [#allocation3], 1
    %s183 = scalar_lea.sflag [#allocation3], 1
    %184 = vsyncpa %s183, 1
    %185 = vsyncpa [#allocation4], 1
    %s186 = scalar_lea.sflag [#allocation4], 1
    %187 = vsyncpa %s186, 1

</llo_original>
